<compile_context>
chip_gen: v7x
topology: tpu7x:2x2x1
jax: 0.10.0
libtpu: 0.0.40
codegen_flags: <defaults>
</compile_context>

<pallas_src>
import functools

import numpy as np
import jax
import jax.numpy as jnp
from jax import lax
from jax.experimental import pallas as pl
from jax.experimental.pallas import tpu as pltpu

EPS = 1e-5

_MiB = 1024 * 1024
_TINY_BYTES = 512 * 1024          # below this: single grid step is fine
_TARGET_TILE_BYTES = 2 * _MiB     # aim ~2 MiB per DMA tile
_MAX_TILE_BYTES = 4 * _MiB        # cap tile so double-buffered in/out + f32
                                  # temporaries fit v7x's 64 MiB VMEM
_MIN_PIPELINE_STEPS = 8           # want >= 8 steps once input is non-tiny


# ------------------------------- kernel ---------------------------------------
def _rmsnorm_kernel(x_ref, g_ref, o_ref, *, d_model, eps):
    # x_ref: (block_rows, d_model) tile, g_ref: (1, d_model) weight.
    x = x_ref[...].astype(jnp.float32)
    # rms^-1 = rsqrt(mean(x^2) + eps): one XLU reduction + one EUP rsqrt.
    ssq = jnp.sum(x * x, axis=-1, keepdims=True)
    inv_rms = lax.rsqrt(ssq * (1.0 / d_model) + eps)
    # Re-read the tile from VMEM for the output multiply so the upcast tile
    # (and the x*x temp) need not stay live across the reduction.
    xr = x_ref[...].astype(jnp.float32)
    g = g_ref[...].astype(jnp.float32)
    o_ref[...] = (xr * inv_rms * g).astype(o_ref.dtype)


# --------------------------- tiling heuristics ----------------------------------
def _sublane_multiple(itemsize: int) -> int:
    return {4: 8, 2: 16, 1: 32}.get(itemsize, 8)


def _choose_block_rows(n_rows: int, d_model: int, itemsize: int) -> int:
    sub = _sublane_multiple(itemsize)
    row_bytes = d_model * itemsize
    total_bytes = n_rows * row_bytes

    if total_bytes <= _TINY_BYTES:
        # Genuinely tiny input: one grid step, whole array resident in VMEM.
        return n_rows

    # Bytes-based target: ~2 MiB per tile, capped at 4 MiB.
    block_rows = max(sub, _TARGET_TILE_BYTES // row_bytes)
    cap_rows = max(sub, _MAX_TILE_BYTES // row_bytes)
    block_rows = min(block_rows, cap_rows)

    # Ensure the grid has at least _MIN_PIPELINE_STEPS steps (and >= 2, so
    # v7x's two TensorCores both get work via the "parallel" axis).
    rows_for_min_steps = max(sub, pl.cdiv(n_rows, _MIN_PIPELINE_STEPS))
    block_rows = min(block_rows, rows_for_min_steps)

    # Round down to the sublane multiple; clamp to valid range.
    block_rows = max(sub, (block_rows // sub) * sub)
    block_rows = min(block_rows, n_rows)
    return block_rows


def _vmem_limit_bytes(block_rows: int, d_model: int, itemsize: int) -> int:
    tile_io = block_rows * d_model * itemsize          # one in / out tile
    tile_f32 = block_rows * d_model * 4                # f32 temporaries
    budget = 2 * tile_io + 2 * tile_io + 2 * tile_f32 + 2 * d_model * 4 + 4 * _MiB
    # Clamp: never below the 16 MiB v5e default scope, never above a value
    # that is safe against v7x's 64 MiB physical VMEM per TensorCore.
    return int(min(max(budget, 16 * _MiB), 64 * _MiB))


# ------------------------------- wrapper ---------------------------------------
def rmsnorm(x, weight, eps=EPS, *, block_rows=None):
    """RMSNorm over the last dim of x. weight: (d_model,)."""
    orig_shape = x.shape
    d_model = orig_shape[-1]
    n_rows = int(np.prod(orig_shape[:-1])) if len(orig_shape) > 1 else 1
    itemsize = jnp.dtype(x.dtype).itemsize

    x2 = x.reshape(n_rows, d_model)
    g2 = weight.reshape(1, d_model)

    if block_rows is None:
        block_rows = _choose_block_rows(n_rows, d_model, itemsize)
    block_rows = max(1, min(block_rows, n_rows))

    grid = (pl.cdiv(n_rows, block_rows),)

    out = pl.pallas_call(
        functools.partial(_rmsnorm_kernel, d_model=d_model, eps=eps),
        out_shape=jax.ShapeDtypeStruct((n_rows, d_model), x.dtype),
        grid=grid,
        in_specs=[
            pl.BlockSpec((block_rows, d_model), lambda i: (i, 0)),  # x rows
            pl.BlockSpec((1, d_model), lambda i: (0, 0)),           # weight (shared)
        ],
        out_specs=pl.BlockSpec((block_rows, d_model), lambda i: (i, 0)),
        compiler_params=pltpu.CompilerParams(
            dimension_semantics=("parallel",),
            vmem_limit_bytes=_vmem_limit_bytes(block_rows, d_model, itemsize),
        ),
    )(x2, g2)

    return out.reshape(orig_shape)


# --------------------------- pure-JAX reference ---------------------------------
def ref_rmsnorm(x, weight, eps=EPS):
    in_dtype = x.dtype
    x32 = x.astype(jnp.float32)
    rms = jnp.sqrt(jnp.sum(x32 * x32, axis=-1, keepdims=True) / x.shape[-1] + eps)
    return (x32 / rms * weight.astype(jnp.float32)).astype(in_dtype)


# ------------------------------------ main --------------------------------------
if __name__ == "__main__":
    BATCH, SEQ, D_MODEL = 2, 8, 32

    key = jax.random.PRNGKey(0)
    kx, kw = jax.random.split(key, 2)

    x = jax.random.normal(kx, (BATCH, SEQ, D_MODEL), jnp.float32)
    # module init is ones; use a non-trivial weight so the gain path is exercised
    weight = 1.0 + 0.1 * jax.random.normal(kw, (D_MODEL,), jnp.float32)

    out = rmsnorm(x, weight)
    out = jax.block_until_ready(out)

    ref = ref_rmsnorm(x, weight)
    np.testing.assert_allclose(np.asarray(out), np.asarray(ref),
                               rtol=1e-5, atol=1e-5)

    # Exercise the tiled (multi-step, ragged-grid) path at a still-small size.
    x_big = jax.random.normal(kx, (40, 136, 256), jnp.float32)  # 40*136 = 5440 rows
    w_big = 1.0 + 0.1 * jax.random.normal(kw, (256,), jnp.float32)
    out_big = jax.block_until_ready(rmsnorm(x_big, w_big, block_rows=512))
    np.testing.assert_allclose(np.asarray(out_big), np.asarray(ref_rmsnorm(x_big, w_big)),
                               rtol=1e-5, atol=1e-5)

    print("KERNEL_OK")
</pallas_src>

<mosaic_0001>
module attributes {stable_mosaic.version = 11 : i64} {
  func.func @_rmsnorm_kernel(%arg0: i32, %arg1: memref<16x32xf32, #tpu.memory_space<vmem>>, %arg2: memref<1x32xf32, #tpu.memory_space<vmem>>, %arg3: memref<16x32xf32, #tpu.memory_space<vmem>>) attributes {dimension_semantics = [#tpu.dimension_semantics<parallel>], iteration_bounds = array<i64: 1>, scalar_prefetch = 0 : i64, scratch_operands = 0 : i64, tpu.core_type = #tpu.core_type<tc>, window_params = [{transform_indices = @transform_0, window_bounds = array<i64: 16, 32>}, {pipeline_mode = #tpu.pipeline_mode<synchronous>, transform_indices = @transform_1, window_bounds = array<i64: 1, 32>}, {transform_indices = @transform_2, window_bounds = array<i64: 16, 32>}]} {
    %c0 = arith.constant 0 : index
    %c0_0 = arith.constant 0 : index
    %0 = vector.load %arg1[%c0, %c0_0] : memref<16x32xf32, #tpu.memory_space<vmem>>, vector<16x32xf32>
    %1 = arith.mulf %0, %0 : vector<16x32xf32>
    %cst = arith.constant dense<0.000000e+00> : vector<16xf32>
    %2 = vector.multi_reduction <add>, %1, %cst [1] : vector<16x32xf32> to vector<16xf32>
    %3 = vector.shape_cast %2 : vector<16xf32> to vector<16x1xf32>
    %cst_1 = arith.constant 3.125000e-02 : f32
    %4 = vector.broadcast %cst_1 : f32 to vector<16x1xf32>
    %5 = arith.mulf %3, %4 : vector<16x1xf32>
    %cst_2 = arith.constant 9.99999974E-6 : f32
    %6 = vector.broadcast %cst_2 : f32 to vector<16x1xf32>
    %7 = arith.addf %5, %6 : vector<16x1xf32>
    %8 = math.rsqrt %7 : vector<16x1xf32>
    %c0_3 = arith.constant 0 : index
    %c0_4 = arith.constant 0 : index
    %9 = vector.load %arg1[%c0_3, %c0_4] : memref<16x32xf32, #tpu.memory_space<vmem>>, vector<16x32xf32>
    %c0_5 = arith.constant 0 : index
    %c0_6 = arith.constant 0 : index
    %10 = vector.load %arg2[%c0_5, %c0_6] : memref<1x32xf32, #tpu.memory_space<vmem>>, vector<1x32xf32>
    %11 = vector.broadcast %8 : vector<16x1xf32> to vector<16x32xf32>
    %12 = arith.mulf %9, %11 : vector<16x32xf32>
    %13 = vector.broadcast %10 : vector<1x32xf32> to vector<16x32xf32>
    %14 = arith.mulf %12, %13 : vector<16x32xf32>
    %c0_7 = arith.constant 0 : index
    %c0_8 = arith.constant 0 : index
    %15 = vector.load %arg3[%c0_7, %c0_8] : memref<16x32xf32, #tpu.memory_space<vmem>>, vector<16x32xf32>
    tpu.vector_store %arg3[%c0_7, %c0_8], %14 {strides = array<i32>} : memref<16x32xf32, #tpu.memory_space<vmem>>, vector<16x32xf32>,
    return
  }
  func.func @transform_0(%arg0: i32) -> (i32, i32) {
    %c0_i32 = arith.constant 0 : i32
    %c0_i32_0 = arith.constant 0 : i32
    return %arg0, %c0_i32 : i32, i32
  }
  func.func @transform_1(%arg0: i32) -> (i32, i32) {
    %c0_i32 = arith.constant 0 : i32
    %c0_i32_0 = arith.constant 0 : i32
    %c0_i32_1 = arith.constant 0 : i32
    return %c0_i32, %c0_i32_0 : i32, i32
  }
  func.func @transform_2(%arg0: i32) -> (i32, i32) {
    %c0_i32 = arith.constant 0 : i32
    %c0_i32_0 = arith.constant 0 : i32
    return %arg0, %c0_i32 : i32, i32
  }
}

</mosaic_0001>

<llo_original>
// kernel: tpu_custom_call.1
$region0: #{tpu_custom_call.1}
  #allocation0 [shape = 'u32[]', space=smem, size = 0x4, offset = 0x4, fixed_abs, tag = 'smem constant byte address 0x4 - core index']
  #allocation1 [shape = 'u32[144,128]{1,0:T(1,128)}', space=vmem, size = 0x12000, scoped, tag = 'internal scratch']
  %s0 = inlined_call_operand.hbm [shape: f32[16,32], index: 0, kind: input, shape index: {}]
  %s1 = inlined_call_operand.vmem [shape: f32[1,32], index: 1, kind: input, shape index: {}]
  %s2 = inlined_call_operand.hbm [shape: f32[16,32], index: 2, kind: output, shape index: {}]
  %s3 = sld [smem:[#allocation0]]
  $region22: #{tpu_custom_call.1} parent=0
    _
  %s5 = ssub.s32 1, %s3
  %s6 = scalar_select 0, %s5, %s3
  $region1: #{tpu_custom_call.1} parent=0
    #allocation2 [shape = 'u8[8192]{0}', space=vmem, size = 0x2000, scoped, tag = 'input window, operand 0, single buffered']
    #allocation3 [shape = 's32[1]{0}', space=sflag, size = 0x4, scoped, tag = 'scoped memory for tpu_custom_call.1']
    #allocation4 [shape = 's32[1]{0}', space=sflag, size = 0x4, scoped, tag = 'scoped memory for tpu_custom_call.1']
    #allocation5 [shape = 'u8[8192]{0}', space=vmem, size = 0x2000, scoped, tag = 'output window, operand 0, single buffered']
    %7 = vsyncpa [#allocation3], 0
    %8 = vsyncpa [#allocation4], 0
    // Predicated region
    $region2: #{tpu_custom_call.1} parent=1 // pred_check
      _
    $region3: #{tpu_custom_call.1} parent=1 // pred_check_branch
      %10 = sbr.rel (0) target = $region5
    $region4: #{tpu_custom_call.1} parent=1 // pred_region
      %s12 = ssub.s32 256, 256
      %13 = vsyncadd [#allocation3], %s12
      %s14 = sshll.u32 [#allocation2], 4
      %s15 = int_to_ptr.vmem [resolvable:$true] %s14
      %20 = dma.hbm_to_vmem [thread:$0]  %s0, 256, %s15, [#allocation3], 128, 128, 8
    $region5: #{tpu_custom_call.1} parent=1 // pred_fallthru
      _
    // Predicated region
    $region6: #{tpu_custom_call.1} parent=1 // pred_check
      _
    $region7: #{tpu_custom_call.1} parent=1 // pred_check_branch
      %22 = sbr.rel (0) target = $region9
    $region8: #{tpu_custom_call.1} parent=1 // pred_region
      _
    $region9: #{tpu_custom_call.1} parent=1 // pred_fallthru
      _
    // Predicated region
    $region10: #{tpu_custom_call.1} parent=1 // pred_check
      _
    $region11: #{tpu_custom_call.1} parent=1 // pred_check_branch
      %24 = sbr.rel (0) target = $region13
    $region12: #{tpu_custom_call.1} parent=1 // pred_region
      %25 = dma.done [#allocation3], 256
    $region13: #{tpu_custom_call.1} parent=1 // pred_fallthru
      _
    %v26 = vld [vmem:[#allocation2] sm:$0xff]
    %v27 = vld [vmem:[#allocation2 + $0x8] sm:$0xff]
    %v28 = vmul.f32 %v26, %v26
    %v29 = vmul.f32 %v27, %v27
    %vm30 = vcmask 261120
    %v31 = vsel %vm30, %v28, 0.0
    %32 = vadd.xlane.f32.xlu0 %v31
    %v33 = vpop.xlane.xlu0 %32
    %v34 = vsel %vm30, %v29, 0.0
    %35 = vadd.xlane.f32.xlu0 %v34
    %v36 = vpop.xlane.xlu0 %35
    %v37 = vmul.f32 %v33, 0.03125
    %v38 = vmul.f32 %v36, 0.03125
    %v39 = vadd.f32 %v37, 1e-05
    %v40 = vadd.f32 %v38, 1e-05
    %v41 = vrsqrt.pop %v39
    %v42 = vrsqrt.pop %v40
    %v43 = vld [vmem:[%s1] sm:$0x1]
    %v44 = vmul.f32 %v26, %v41
    %v45 = vmul.f32 %v27, %v42
    %v47 = vlaneseq
    %v48 = vshrl.u32 %v47, 7
    %v49 = vsub.s32 0, %v48
    %v50 = vrot.slane %v43, %v49
    %v52 = vmul.f32 %v44, %v50
    %v53 = vmul.f32 %v45, %v50
    %54 = vst.msk [vmem:[#allocation5] sm:$0xff] %vm30, %v52
    %55 = vst.msk [vmem:[#allocation5 + $0x8] sm:$0xff] %vm30, %v53
    // Predicated region
    $region14: #{tpu_custom_call.1} parent=1 // pred_check
      _
    $region15: #{tpu_custom_call.1} parent=1 // pred_check_branch
      %57 = sbr.rel (0) target = $region17
    $region16: #{tpu_custom_call.1} parent=1 // pred_region
      %s59 = ssub.s32 256, 256
      %60 = vsyncadd [#allocation4], %s59
      %s61 = sshll.u32 [#allocation5], 4
      %s62 = int_to_ptr.vmem [resolvable:$true] %s61
      %67 = dma.vmem_to_hbm [thread:$0]  %s62, 256, %s2, [#allocation4], 128, 128, 8
    $region17: #{tpu_custom_call.1} parent=1 // pred_fallthru
      _
    // Predicated region
    $region18: #{tpu_custom_call.1} parent=1 // pred_check
      _
    $region19: #{tpu_custom_call.1} parent=1 // pred_check_branch
      %69 = sbr.rel (0) target = $region21
    $region20: #{tpu_custom_call.1} parent=1 // pred_region
      %70 = dma.done [#allocation4], 256
    $region21: #{tpu_custom_call.1} parent=1 // pred_fallthru
      _
    %71 = vsyncpa [#allocation3], 1
    %72 = vsyncpa [#allocation4], 1

</llo_original>
